<compile_context>
chip_gen: v5e
topology: v5e:2x2
jax: 0.10.0
libtpu: 0.0.40
codegen_flags: <defaults>
</compile_context>

<pallas_src>
import jax
import jax.numpy as jnp
from jax.experimental import pallas as pl
from jax.experimental.pallas import tpu as pltpu


def _make_kernel(batch_size: int, block_b: int):
    inv_b = 1.0 / float(batch_size)

    def kernel(scale_ref, logits_ref, targets_ref, out_ref):
        # scale_ref:   SMEM f32[1]        (entropic scale, 10.0 train / 1.0 eval)
        # logits_ref:  VMEM [TB, C]       (native dtype, cast to f32 here)
        # targets_ref: VMEM [TB, 1] int32
        # out_ref:     SMEM f32[1, 1]     (scalar loss accumulator)
        i = pl.program_id(0)

        @pl.when(i == 0)
        def _():
            out_ref[0, 0] = jnp.float32(0.0)

        z = logits_ref[...].astype(jnp.float32) * scale_ref[0]          # [TB, C]
        tb, c = z.shape

        # Stable logsumexp over classes (single in-kernel reduce; C untiled).
        m = jnp.max(z, axis=1, keepdims=True)                           # [TB, 1]
        lse = m + jnp.log(jnp.sum(jnp.exp(z - m), axis=1, keepdims=True))

        # Pick z at the target class via a one-hot select (no scalar loops).
        col = jax.lax.broadcasted_iota(jnp.int32, (tb, c), 1)           # [TB, C]
        tgt = targets_ref[...]                                          # [TB, 1]
        z_t = jnp.sum(jnp.where(col == tgt, z, 0.0), axis=1, keepdims=True)

        per_row = lse - z_t                                             # [TB, 1]

        # Mask rows past the real batch (last tile may be padded).
        row = i * block_b + jax.lax.broadcasted_iota(jnp.int32, (tb, 1), 0)
        per_row = jnp.where(row < batch_size, per_row, 0.0)

        # Fold the mean's 1/B into the per-tile partial sum and accumulate.
        out_ref[0, 0] += jnp.sum(per_row) * jnp.float32(inv_b)

    return kernel


def dismax_loss_second_part(logits, targets, *, entropic_scale=10.0,
                            training=True, block_b=128):
    """logits [B, C], targets [B] int -> scalar f32 loss (matches PyTorch)."""
    B, C = logits.shape
    # Full batch as one tile when it fits; otherwise 128-row tiles (multiple
    # of the 8-sublane granularity), last tile masked in-kernel.
    tb = B if B <= block_b else block_b
    grid = (pl.cdiv(B, tb),)

    scale_val = float(entropic_scale) if training else 1.0
    scale = jnp.full((1,), scale_val, dtype=jnp.float32)
    targets2d = targets.astype(jnp.int32).reshape(B, 1)

    kernel = _make_kernel(B, tb)

    out = pl.pallas_call(
        kernel,
        out_shape=jax.ShapeDtypeStruct((1, 1), jnp.float32),
        grid=grid,
        in_specs=[
            pl.BlockSpec(memory_space=pltpu.MemorySpace.SMEM),      # entropic scale
            pl.BlockSpec((tb, C), lambda i: (i, 0)),                # logits tile
            pl.BlockSpec((tb, 1), lambda i: (i, 0)),                # targets tile
        ],
        out_specs=pl.BlockSpec(memory_space=pltpu.MemorySpace.SMEM),
        compiler_params=pltpu.CompilerParams(
            # The batch grid axis reduces into a single scalar output, so it
            # must stay "arbitrary" (sequential accumulation).
            dimension_semantics=("arbitrary",)),
    )(scale, logits, targets2d)

    return out[0, 0]


def _reference(logits, targets, *, entropic_scale=10.0, training=True):
    """Pure-JAX reference mirroring the PyTorch module."""
    s = entropic_scale if training else 1.0
    z = s * logits.astype(jnp.float32)
    logp = jax.nn.log_softmax(z, axis=1)
    nll = -logp[jnp.arange(logits.shape[0]), targets]
    return jnp.mean(nll)


if __name__ == "__main__":
    # Small, deterministic shapes: batch=8, num_classes=128 (lane-aligned).
    batch = 8
    num_classes = 128

    key = jax.random.PRNGKey(0)
    k_logits, k_tgt = jax.random.split(key)
    logits = jax.random.normal(k_logits, (batch, num_classes), dtype=jnp.float32)
    targets = jax.random.randint(k_tgt, (batch,), 0, num_classes, dtype=jnp.int32)

    # Training mode (entropic_scale = 10.0).
    loss_train = dismax_loss_second_part(logits, targets, training=True)
    loss_train = jax.block_until_ready(loss_train)
    ref_train = _reference(logits, targets, training=True)
    assert loss_train.shape == ()
    assert jnp.allclose(loss_train, ref_train, atol=1e-4, rtol=1e-5), (
        f"train: kernel={loss_train} ref={ref_train}")

    # Eval mode (plain softmax) reuses the same compiled kernel (scale is a
    # runtime scalar).
    loss_eval = dismax_loss_second_part(logits, targets, training=False)
    loss_eval = jax.block_until_ready(loss_eval)
    ref_eval = _reference(logits, targets, training=False)
    assert jnp.allclose(loss_eval, ref_eval, atol=1e-4, rtol=1e-5), (
        f"eval: kernel={loss_eval} ref={ref_eval}")

    print("KERNEL_OK")
</pallas_src>

<mosaic_0001>
module attributes {stable_mosaic.version = 11 : i64} {
  func.func @kernel(%arg0: i32, %arg1: memref<1xf32, #tpu.memory_space<smem>>, %arg2: memref<8x128xf32, #tpu.memory_space<vmem>>, %arg3: memref<8x1xi32, #tpu.memory_space<vmem>>, %arg4: memref<1x1xf32, #tpu.memory_space<smem>>) attributes {dimension_semantics = [#tpu.dimension_semantics<arbitrary>], iteration_bounds = array<i64: 1>, scalar_prefetch = 0 : i64, scratch_operands = 0 : i64, tpu.core_type = #tpu.core_type<tc>, window_params = [{transform_indices = @transform_0, window_bounds = array<i64: 1>}, {transform_indices = @transform_1, window_bounds = array<i64: 8, 128>}, {transform_indices = @transform_2, window_bounds = array<i64: 8, 1>}, {transform_indices = @transform_3, window_bounds = array<i64: 1, 1>}]} {
    %c0_i32 = arith.constant 0 : i32
    %0 = arith.cmpi eq, %arg0, %c0_i32 : i32
    %1 = arith.extui %0 : i1 to i32
    %c0_i32_0 = arith.constant 0 : i32
    %2 = arith.cmpi ne, %1, %c0_i32_0 : i32
    scf.if %2 {
      %cst_16 = arith.constant 0.000000e+00 : f32
      %c0_17 = arith.constant 0 : index
      %c0_18 = arith.constant 0 : index
      %41 = memref.load %arg4[%c0_17, %c0_18] : memref<1x1xf32, #tpu.memory_space<smem>>
      memref.store %cst_16, %arg4[%c0_17, %c0_18] : memref<1x1xf32, #tpu.memory_space<smem>>
    } else {
    }
    %c0 = arith.constant 0 : index
    %c0_1 = arith.constant 0 : index
    %3 = vector.load %arg2[%c0, %c0_1] : memref<8x128xf32, #tpu.memory_space<vmem>>, vector<8x128xf32>
    %c0_2 = arith.constant 0 : index
    %4 = memref.load %arg1[%c0_2] : memref<1xf32, #tpu.memory_space<smem>>
    %5 = vector.broadcast %4 : f32 to vector<8x128xf32>
    %6 = arith.mulf %3, %5 : vector<8x128xf32>
    %cst = arith.constant dense<0xFF800000> : vector<8xf32>
    %7 = vector.multi_reduction <maximumf>, %6, %cst [1] : vector<8x128xf32> to vector<8xf32>
    %8 = vector.shape_cast %7 : vector<8xf32> to vector<8x1xf32>
    %9 = vector.broadcast %8 : vector<8x1xf32> to vector<8x128xf32>
    %10 = arith.subf %6, %9 : vector<8x128xf32>
    %11 = math.exp %10 : vector<8x128xf32>
    %cst_3 = arith.constant dense<0.000000e+00> : vector<8xf32>
    %12 = vector.multi_reduction <add>, %11, %cst_3 [1] : vector<8x128xf32> to vector<8xf32>
    %13 = vector.shape_cast %12 : vector<8xf32> to vector<8x1xf32>
    %14 = math.log %13 : vector<8x1xf32>
    %15 = arith.addf %8, %14 : vector<8x1xf32>
    %16 = tpu.iota {dimensions = array<i32: 1>} : vector<8x128xi32>
    %c0_4 = arith.constant 0 : index
    %c0_5 = arith.constant 0 : index
    %17 = vector.load %arg3[%c0_4, %c0_5] : memref<8x1xi32, #tpu.memory_space<vmem>>, vector<8x1xi32>
    %18 = vector.broadcast %17 : vector<8x1xi32> to vector<8x128xi32>
    %19 = arith.cmpi eq, %16, %18 : vector<8x128xi32>
    %cst_6 = arith.constant 0.000000e+00 : f32
    %20 = vector.broadcast %cst_6 : f32 to vector<8x128xf32>
    %21 = arith.select %19, %6, %20 : vector<8x128xi1>, vector<8x128xf32>
    %cst_7 = arith.constant dense<0.000000e+00> : vector<8xf32>
    %22 = vector.multi_reduction <add>, %21, %cst_7 [1] : vector<8x128xf32> to vector<8xf32>
    %23 = vector.shape_cast %22 : vector<8xf32> to vector<8x1xf32>
    %24 = arith.subf %15, %23 : vector<8x1xf32>
    %c8_i32 = arith.constant 8 : i32
    %25 = arith.muli %arg0, %c8_i32 : i32
    %26 = tpu.iota {dimensions = array<i32: 0>} : vector<8x1xi32>
    %27 = vector.broadcast %25 : i32 to vector<8x1xi32>
    %28 = arith.addi %27, %26 : vector<8x1xi32>
    %c8_i32_8 = arith.constant 8 : i32
    %29 = vector.broadcast %c8_i32_8 : i32 to vector<8x1xi32>
    %30 = arith.cmpi slt, %28, %29 : vector<8x1xi32>
    %cst_9 = arith.constant 0.000000e+00 : f32
    %31 = vector.broadcast %cst_9 : f32 to vector<8x1xf32>
    %32 = arith.select %30, %24, %31 : vector<8x1xi1>, vector<8x1xf32>
    %c0_10 = arith.constant 0 : index
    %c0_11 = arith.constant 0 : index
    %33 = memref.load %arg4[%c0_10, %c0_11] : memref<1x1xf32, #tpu.memory_space<smem>>
    %34 = vector.shape_cast %32 : vector<8x1xf32> to vector<1x8x1xf32>
    %cst_12 = arith.constant dense<0.000000e+00> : vector<1xf32>
    %35 = vector.multi_reduction <add>, %34, %cst_12 [1, 2] : vector<1x8x1xf32> to vector<1xf32>
    %36 = vector.shape_cast %35 : vector<1xf32> to vector<1x1x1xf32>
    %37 = vector.extract %36[0, 0, 0] : f32 from vector<1x1x1xf32>
    %cst_13 = arith.constant 1.250000e-01 : f32
    %38 = arith.mulf %37, %cst_13 : f32
    %39 = arith.addf %33, %38 : f32
    %c0_14 = arith.constant 0 : index
    %c0_15 = arith.constant 0 : index
    %40 = memref.load %arg4[%c0_14, %c0_15] : memref<1x1xf32, #tpu.memory_space<smem>>
    memref.store %39, %arg4[%c0_14, %c0_15] : memref<1x1xf32, #tpu.memory_space<smem>>
    return
  }
  func.func @transform_0(%arg0: i32) -> i32 {
    %c0_i32 = arith.constant 0 : i32
    %c0_i32_0 = arith.constant 0 : i32
    return %c0_i32 : i32
  }
  func.func @transform_1(%arg0: i32) -> (i32, i32) {
    %c0_i32 = arith.constant 0 : i32
    %c0_i32_0 = arith.constant 0 : i32
    return %arg0, %c0_i32 : i32, i32
  }
  func.func @transform_2(%arg0: i32) -> (i32, i32) {
    %c0_i32 = arith.constant 0 : i32
    %c0_i32_0 = arith.constant 0 : i32
    return %arg0, %c0_i32 : i32, i32
  }
  func.func @transform_3(%arg0: i32) -> (i32, i32) {
    %c0_i32 = arith.constant 0 : i32
    %c0_i32_0 = arith.constant 0 : i32
    %c0_i32_1 = arith.constant 0 : i32
    return %c0_i32, %c0_i32_0 : i32, i32
  }
}

</mosaic_0001>

<llo_original>
// kernel: tpu_custom_call.1
$region0: #{tpu_custom_call.1}
  #allocation0 [shape = 'u32[]', space=smem, size = 0x4, offset = 0x4, fixed_abs, tag = 'smem constant byte address 0x4 - core index']
  #allocation1 [shape = 'u32[72,128]{1,0:T(1,128)}', space=vmem, size = 0x9000, scoped, tag = 'internal scratch']
  #allocation2 [shape = 'f32[1]{0:T(128)S(6)}', space=smem, size = 0x200, scoped, tag = 'scoped memory for tpu_custom_call.1']
  %s0 = inlined_call_operand.<no memory space> [shape: f32[1], index: 0, kind: input, shape index: {}]
  %s1 = inlined_call_operand.vmem [shape: f32[8,128], index: 1, kind: input, shape index: {}]
  %s2 = inlined_call_operand.vmem [shape: s32[8,1], index: 2, kind: input, shape index: {}]
  %s3 = inlined_call_operand.hbm [shape: f32[1,1], index: 3, kind: output, shape index: {}]
  %s4 = sld [smem:[#allocation0]]
  $region26: #{tpu_custom_call.1} parent=0
    _
  %s6 = ssub.s32 1, %s4
  %s7 = scalar_select 0, %s6, %s4
  %8 = sst [smem:[#allocation2]] %s0
  $region1: #{tpu_custom_call.1} parent=0
    #allocation3 [shape = 'u8[512]{0}', space=smem, size = 0x200, scoped, tag = 'output window, operand 0, single buffered']
    #allocation4 [shape = 's32[1]{0}', space=sflag, size = 0x4, scoped, tag = 'scoped memory for tpu_custom_call.1']
    %9 = vsyncpa [#allocation4], 0
    // Predicated region
    $region2: #{tpu_custom_call.1} parent=1 // pred_check
      _
    $region3: #{tpu_custom_call.1} parent=1 // pred_check_branch
      %11 = sbr.rel (0) target = $region5
    $region4: #{tpu_custom_call.1} parent=1 // pred_region
      _
    $region5: #{tpu_custom_call.1} parent=1 // pred_fallthru
      _
    // Predicated region
    $region6: #{tpu_custom_call.1} parent=1 // pred_check
      _
    $region7: #{tpu_custom_call.1} parent=1 // pred_check_branch
      %13 = sbr.rel (0) target = $region9
    $region8: #{tpu_custom_call.1} parent=1 // pred_region
      _
    $region9: #{tpu_custom_call.1} parent=1 // pred_fallthru
      _
    // Predicated region
    $region10: #{tpu_custom_call.1} parent=1 // pred_check
      _
    $region11: #{tpu_custom_call.1} parent=1 // pred_check_branch
      %15 = sbr.rel (0) target = $region13
    $region12: #{tpu_custom_call.1} parent=1 // pred_region
      _
    $region13: #{tpu_custom_call.1} parent=1 // pred_fallthru
      _
    %p16 = scmp.eq.s32.totalorder 0, 0
    // Predicated region
    $region14: #{tpu_custom_call.1} parent=1 // pred_check
      %p17 = pneg %p16
    $region15: #{tpu_custom_call.1} parent=1 // pred_check_branch
      %19 = sbr.rel (%p17) target = $region17
    $region16: #{tpu_custom_call.1} parent=1 // pred_region
      %s20 = scalar_lea.smem [#allocation3], 0
      %21 = sst [smem:[%s20]] 0.0
    $region17: #{tpu_custom_call.1} parent=1 // pred_fallthru
      _
    %v22 = vld [vmem:[%s1] sm:$0xff]
    %s23 = sld [smem:[#allocation2]]
    %v24 = vstv %s23
    %v25 = vmul.f32 %v22, %v24
    %26 = vmax.xlane.f32.xlu0 %v25
    %v27 = vpop.xlane.xlu0 %26
    %v28 = vsub.f32 %v25, %v27
    %v29 = vmul.f32 %v28, 1.442695
    %v30 = vpow.pop %v29
    %31 = vadd.xlane.f32.xlu0 %v30
    %v32 = vpop.xlane.xlu0 %31
    %v33 = vlog2.pop %v32
    %v34 = vmul.f32 %v33, 0.6931472
    %v35 = vadd.f32 %v27, %v34
    %v36 = vlaneseq
    %v37 = vand.u32 %v36, 127
    %v38 = vld [vmem:[%s2] sm:$0xff]
    %39 = vset.pattern.permute.xlu0 0
    %40 = vperm.xlu0 %39, %v38
    %v41 = vpop.permute.xlu0 %40
    %vm42 = vcmp.eq.s32.totalorder %v37, %v41
    %v43 = vsel %vm42, %v25, 0.0
    %44 = vadd.xlane.f32.xlu0 %v43
    %v45 = vpop.xlane.xlu0 %44
    %v46 = vsub.f32 %v35, %v45
    %s47 = smul.u32 0, 8
    %v48 = vlaneseq
    %v49 = vshrl.u32 %v48, 7
    %v50 = vstv %s47
    %v51 = vadd.s32 %v50, %v49
    %vm52 = vcmp.lt.s32.totalorder %v51, 8
    %v53 = vsel %vm52, %v46, 0.0
    %s54 = sld [smem:[#allocation3]]
    %vm55 = vcmask 7168
    %v56 = vsel %vm55, %v53, 0.0
    %57 = vadd.xlane.f32.xlu0 %v56
    %v58 = vpop.xlane.xlu0 %57
    %v59 = vrot.slane %v58, 4
    %v60 = vadd.f32 %v58, %v59
    %v61 = vrot.slane %v60, 2
    %v62 = vadd.f32 %v60, %v61
    %v63 = vrot.slane %v62, 1
    %v64 = vadd.f32 %v62, %v63
    %s65 = vtos %v64
    %s66 = smul.f32 %s65, 0.125
    %s67 = sadd.f32 %s54, %s66
    %s68 = scalar_lea.smem [#allocation3], 0
    %69 = sst [smem:[%s68]] %s67
    // Predicated region
    $region18: #{tpu_custom_call.1} parent=1 // pred_check
      _
    $region19: #{tpu_custom_call.1} parent=1 // pred_check_branch
      %71 = sbr.rel (0) target = $region21
    $region20: #{tpu_custom_call.1} parent=1 // pred_region
      %73 = vsyncadd [#allocation4], 0
      %s75 = sshll.u32 %s3, 4
      %s76 = int_to_ptr.hbm [resolvable:$true] %s75
      %78 = dma.smem_to_hbm [#allocation3], 16, %s76, [#allocation4]
    $region21: #{tpu_custom_call.1} parent=1 // pred_fallthru
      _
    // Predicated region
    $region22: #{tpu_custom_call.1} parent=1 // pred_check
      _
    $region23: #{tpu_custom_call.1} parent=1 // pred_check_branch
      %80 = sbr.rel (0) target = $region25
    $region24: #{tpu_custom_call.1} parent=1 // pred_region
      %82 = dma.done [#allocation4], 16
    $region25: #{tpu_custom_call.1} parent=1 // pred_fallthru
      _
    %83 = sfence
    %84 = vsyncpa [#allocation4], 1

</llo_original>
